<compile_context>
chip_gen: v6e
topology: v6e:2x2x1
jax: 0.10.0
libtpu: 0.0.40
codegen_flags: <defaults>
</compile_context>

<pallas_src>
import jax
import jax.numpy as jnp
from jax.experimental import pallas as pl
from jax.experimental.pallas import tpu as pltpu


def _top1_loss_kernel(x_ref, out_ref, acc_ref):
    i = pl.program_id(0)

    @pl.when(i == 0)
    def _init():
        acc_ref[...] = jnp.zeros_like(acc_ref)

    x = x_ref[...].astype(jnp.float32)          # (TR, B)
    tr, b = x.shape

    # Positive score of global row (i*TR + r) sits at column (i*TR + r).
    row = jax.lax.broadcasted_iota(jnp.int32, x.shape, 0)
    col = jax.lax.broadcasted_iota(jnp.int32, x.shape, 1)
    diag_mask = (row + i * tr) == col
    diag_col = jnp.sum(jnp.where(diag_mask, x, 0.0), axis=1, keepdims=True)  # (TR, 1)

    # diff = -(diag.expand_as(logit) - logit) = logit - diag_col
    diff = x - diag_col

    # sigmoid(z) = 0.5*tanh(0.5*z) + 0.5 ; constants folded in at finalize.
    # TODO(synk): on v6e/v7x the tanh could be evaluated in bf16 for ~2x EUP
    # throughput (keep the sum in f32); kept f32 here for v5e portability.
    t = jnp.tanh(0.5 * diff) + jnp.tanh(0.5 * (x * x))                       # (TR, B)
    acc_ref[...] += 0.5 * jnp.sum(t, keepdims=True)                          # (1, 1)

    @pl.when(i == pl.num_programs(0) - 1)
    def _finalize():
        n = jnp.float32(b * b)
        # + 1.0 = the two folded 0.5 constants (one per sigmoid), already averaged.
        out_ref[...] = acc_ref[...] / n + 1.0


def _pick_row_tile(B: int, itemsize: int, vmem_budget_bytes: int = 8 * 1024 * 1024) -> int:
    """Largest row tile that (a) divides B, (b) respects (8,128) tiling, and
    (c) keeps the double-buffered input slab comfortably inside scoped VMEM
    on every chip generation (v7x has only 64 MiB physical / 32 MiB scoped)."""
    if B % 8 != 0:
        return B  # full-extent block: (8,128) rule satisfied by equaling array dims
    for tr in (1024, 512, 256, 128, 64, 32, 16, 8):
        if B % tr == 0 and 2 * tr * B * itemsize <= vmem_budget_bytes:
            return tr
    return 8


def top1_loss(logit: jax.Array, row_tile: int | None = None) -> jax.Array:
    """TOP1 loss over a (B, B) logit matrix; returns a scalar f32.

    bf16 logits are accepted as-is (do not pre-cast to f32 in the caller:
    reading bf16 halves the HBM traffic of this single-pass kernel)."""
    B = logit.shape[0]
    assert logit.shape == (B, B), "logit must be square (BxB)"

    itemsize = jnp.dtype(logit.dtype).itemsize
    if row_tile is None:
        row_tile = _pick_row_tile(B, itemsize)
    assert B % row_tile == 0, "row_tile must divide B"
    assert row_tile % 8 == 0 or row_tile == B, "row_tile must be a multiple of 8"

    grid = (B // row_tile,)

    cost = pl.CostEstimate(
        flops=8 * B * B,
        transcendentals=2 * B * B,
        bytes_accessed=B * B * itemsize + 4,
    )

    # TODO(synk): on v7x, split the row tiles across the 2 TensorCores via a
    # leading size-2 "parallel" grid axis emitting (2,1) partial sums.
    out = pl.pallas_call(
        _top1_loss_kernel,
        out_shape=jax.ShapeDtypeStruct((1, 1), jnp.float32),
        grid=grid,
        in_specs=[pl.BlockSpec((row_tile, B), lambda i: (i, 0))],
        out_specs=pl.BlockSpec((1, 1), lambda i: (0, 0)),
        scratch_shapes=[pltpu.VMEM((1, 1), jnp.float32)],
        compiler_params=pltpu.CompilerParams(
            dimension_semantics=("arbitrary",),
        ),
        cost_estimate=cost,
    )(logit)
    return out[0, 0]


def _top1_loss_ref(logit: jax.Array) -> jax.Array:
    x = logit.astype(jnp.float32)
    diag = jnp.diag(x).reshape(-1, 1)
    diff = x - diag
    return jax.nn.sigmoid(diff).mean() + jax.nn.sigmoid(x * x).mean()


if __name__ == "__main__":
    key = jax.random.PRNGKey(0)
    k1, k2 = jax.random.split(key)

    # Small single-tile case.
    B1 = 8
    logit1 = jax.random.normal(k1, (B1, B1), dtype=jnp.float32)
    loss1 = jax.block_until_ready(top1_loss(logit1))
    ref1 = jax.block_until_ready(_top1_loss_ref(logit1))
    assert jnp.allclose(loss1, ref1, atol=1e-5, rtol=1e-5), (loss1, ref1)

    # Multi-tile case: exercises the row-tiled accumulator path (grid of 4 steps).
    B2 = 32
    logit2 = jax.random.normal(k2, (B2, B2), dtype=jnp.float32)
    loss2 = jax.block_until_ready(top1_loss(logit2, row_tile=8))
    ref2 = jax.block_until_ready(_top1_loss_ref(logit2))
    assert jnp.allclose(loss2, ref2, atol=1e-5, rtol=1e-5), (loss2, ref2)

    print("KERNEL_OK")
</pallas_src>

<mosaic_0001>
module attributes {stable_mosaic.version = 11 : i64} {
  func.func @_top1_loss_kernel(%arg0: i32, %arg1: memref<8x8xf32, #tpu.memory_space<vmem>>, %arg2: memref<1x1xf32, #tpu.memory_space<vmem>>, %arg3: memref<1x1xf32, #tpu.memory_space<vmem>>) attributes {dimension_semantics = [#tpu.dimension_semantics<arbitrary>], iteration_bounds = array<i64: 1>, scalar_prefetch = 0 : i64, scratch_operands = 1 : i64, tpu.core_type = #tpu.core_type<tc>, window_params = [{transform_indices = @transform_0, window_bounds = array<i64: 8, 8>}, {pipeline_mode = #tpu.pipeline_mode<synchronous>, transform_indices = @transform_1, window_bounds = array<i64: 1, 1>}]} {
    %c0_i32 = arith.constant 0 : i32
    %0 = arith.cmpi eq, %arg0, %c0_i32 : i32
    %1 = arith.extui %0 : i1 to i32
    %c0_i32_0 = arith.constant 0 : i32
    %2 = arith.cmpi ne, %1, %c0_i32_0 : i32
    scf.if %2 {
      %cst_13 = arith.constant 0.000000e+00 : f32
      %37 = vector.broadcast %cst_13 : f32 to vector<1x1xf32>
      %c0_14 = arith.constant 0 : index
      %c0_15 = arith.constant 0 : index
      %38 = vector.load %arg3[%c0_14, %c0_15] : memref<1x1xf32, #tpu.memory_space<vmem>>, vector<1x1xf32>
      tpu.vector_store %arg3[%c0_14, %c0_15], %37 {strides = array<i32>} : memref<1x1xf32, #tpu.memory_space<vmem>>, vector<1x1xf32>,
    } else {
    }
    %c0 = arith.constant 0 : index
    %c0_1 = arith.constant 0 : index
    %3 = vector.load %arg1[%c0, %c0_1] : memref<8x8xf32, #tpu.memory_space<vmem>>, vector<8x8xf32>
    %4 = tpu.iota {dimensions = array<i32: 0>} : vector<8x8xi32>
    %5 = tpu.iota {dimensions = array<i32: 1>} : vector<8x8xi32>
    %c8_i32 = arith.constant 8 : i32
    %6 = arith.muli %arg0, %c8_i32 : i32
    %7 = vector.broadcast %6 : i32 to vector<8x8xi32>
    %8 = arith.addi %4, %7 : vector<8x8xi32>
    %9 = arith.cmpi eq, %8, %5 : vector<8x8xi32>
    %cst = arith.constant 0.000000e+00 : f32
    %10 = vector.broadcast %cst : f32 to vector<8x8xf32>
    %11 = arith.select %9, %3, %10 : vector<8x8xi1>, vector<8x8xf32>
    %cst_2 = arith.constant dense<0.000000e+00> : vector<8xf32>
    %12 = vector.multi_reduction <add>, %11, %cst_2 [1] : vector<8x8xf32> to vector<8xf32>
    %13 = vector.shape_cast %12 : vector<8xf32> to vector<8x1xf32>
    %14 = vector.broadcast %13 : vector<8x1xf32> to vector<8x8xf32>
    %15 = arith.subf %3, %14 : vector<8x8xf32>
    %cst_3 = arith.constant 5.000000e-01 : f32
    %16 = vector.broadcast %cst_3 : f32 to vector<8x8xf32>
    %17 = arith.mulf %16, %15 : vector<8x8xf32>
    %18 = math.tanh %17 : vector<8x8xf32>
    %19 = arith.mulf %3, %3 : vector<8x8xf32>
    %cst_4 = arith.constant 5.000000e-01 : f32
    %20 = vector.broadcast %cst_4 : f32 to vector<8x8xf32>
    %21 = arith.mulf %20, %19 : vector<8x8xf32>
    %22 = math.tanh %21 : vector<8x8xf32>
    %23 = arith.addf %18, %22 : vector<8x8xf32>
    %c0_5 = arith.constant 0 : index
    %c0_6 = arith.constant 0 : index
    %24 = vector.load %arg3[%c0_5, %c0_6] : memref<1x1xf32, #tpu.memory_space<vmem>>, vector<1x1xf32>
    %25 = vector.shape_cast %23 : vector<8x8xf32> to vector<1x8x8xf32>
    %cst_7 = arith.constant dense<0.000000e+00> : vector<1xf32>
    %26 = vector.multi_reduction <add>, %25, %cst_7 [1, 2] : vector<1x8x8xf32> to vector<1xf32>
    %27 = vector.shape_cast %26 : vector<1xf32> to vector<1x1x1xf32>
    %28 = vector.extract %27[0, 0, 0] : f32 from vector<1x1x1xf32>
    %29 = vector.broadcast %28 : f32 to vector<1x1xf32>
    %cst_8 = arith.constant 5.000000e-01 : f32
    %30 = vector.broadcast %cst_8 : f32 to vector<1x1xf32>
    %31 = arith.mulf %30, %29 : vector<1x1xf32>
    %32 = arith.addf %24, %31 : vector<1x1xf32>
    %c0_9 = arith.constant 0 : index
    %c0_10 = arith.constant 0 : index
    %33 = vector.load %arg3[%c0_9, %c0_10] : memref<1x1xf32, #tpu.memory_space<vmem>>, vector<1x1xf32>
    tpu.vector_store %arg3[%c0_9, %c0_10], %32 {strides = array<i32>} : memref<1x1xf32, #tpu.memory_space<vmem>>, vector<1x1xf32>,
    %c0_i32_11 = arith.constant 0 : i32
    %34 = arith.cmpi eq, %arg0, %c0_i32_11 : i32
    %35 = arith.extui %34 : i1 to i32
    %c0_i32_12 = arith.constant 0 : i32
    %36 = arith.cmpi ne, %35, %c0_i32_12 : i32
    scf.if %36 {
      %c0_13 = arith.constant 0 : index
      %c0_14 = arith.constant 0 : index
      %37 = vector.load %arg3[%c0_13, %c0_14] : memref<1x1xf32, #tpu.memory_space<vmem>>, vector<1x1xf32>
      %cst_15 = arith.constant 6.400000e+01 : f32
      %38 = vector.broadcast %cst_15 : f32 to vector<1x1xf32>
      %39 = arith.divf %37, %38 : vector<1x1xf32>
      %cst_16 = arith.constant 1.000000e+00 : f32
      %40 = vector.broadcast %cst_16 : f32 to vector<1x1xf32>
      %41 = arith.addf %39, %40 : vector<1x1xf32>
      %c0_17 = arith.constant 0 : index
      %c0_18 = arith.constant 0 : index
      %42 = vector.load %arg2[%c0_17, %c0_18] : memref<1x1xf32, #tpu.memory_space<vmem>>, vector<1x1xf32>
      tpu.vector_store %arg2[%c0_17, %c0_18], %41 {strides = array<i32>} : memref<1x1xf32, #tpu.memory_space<vmem>>, vector<1x1xf32>,
    } else {
    }
    return
  }
  func.func @transform_0(%arg0: i32) -> (i32, i32) {
    %c0_i32 = arith.constant 0 : i32
    %c0_i32_0 = arith.constant 0 : i32
    return %arg0, %c0_i32 : i32, i32
  }
  func.func @transform_1(%arg0: i32) -> (i32, i32) {
    %c0_i32 = arith.constant 0 : i32
    %c0_i32_0 = arith.constant 0 : i32
    %c0_i32_1 = arith.constant 0 : i32
    return %c0_i32, %c0_i32_0 : i32, i32
  }
}

</mosaic_0001>

<llo_original>
// kernel: tpu_custom_call.1
$region0: #{tpu_custom_call.1}
  #allocation0 [shape = 'u32[]', space=smem, size = 0x4, offset = 0x4, fixed_abs, tag = 'smem constant byte address 0x4 - core index']
  #allocation1 [shape = 'u32[144,128]{1,0:T(1,128)}', space=vmem, size = 0x12000, scoped, tag = 'internal scratch']
  #allocation2 [shape = 'f32[1,1]{1,0:T(1,128)}', space=vmem, size = 0x200, scoped, tag = 'scratch operand']
  %s0 = inlined_call_operand.hbm [shape: f32[8,8], index: 0, kind: input, shape index: {}]
  %s1 = inlined_call_operand.hbm [shape: f32[1,1], index: 1, kind: output, shape index: {}]
  %s2 = sld [smem:[#allocation0]]
  $region26: #{tpu_custom_call.1} parent=0
    _
  %s4 = ssub.s32 1, %s2
  %s5 = scalar_select 0, %s4, %s2
  $region1: #{tpu_custom_call.1} parent=0
    #allocation3 [shape = 'u8[4096]{0}', space=vmem, size = 0x1000, scoped, tag = 'input window, operand 0, single buffered']
    #allocation4 [shape = 's32[1]{0}', space=sflag, size = 0x4, scoped, tag = 'scoped memory for tpu_custom_call.1']
    #allocation5 [shape = 's32[1]{0}', space=sflag, size = 0x4, scoped, tag = 'scoped memory for tpu_custom_call.1']
    #allocation6 [shape = 'u8[512]{0}', space=vmem, size = 0x400, scoped, tag = 'output window, operand 0, single buffered']
    %6 = vsyncpa [#allocation4], 0
    %7 = vsyncpa [#allocation5], 0
    // Predicated region
    $region2: #{tpu_custom_call.1} parent=1 // pred_check
      _
    $region3: #{tpu_custom_call.1} parent=1 // pred_check_branch
      %9 = sbr.rel (0) target = $region5
    $region4: #{tpu_custom_call.1} parent=1 // pred_region
      %s11 = ssub.s32 128, 128
      %12 = vsyncadd [#allocation4], %s11
      %s14 = sshll.u32 [#allocation3], 4
      %s15 = int_to_ptr.vmem [resolvable:$true] %s14
      %17 = dma.hbm_to_vmem [thread:$0]  %s0, 128, %s15, [#allocation4]
    $region5: #{tpu_custom_call.1} parent=1 // pred_fallthru
      _
    // Predicated region
    $region6: #{tpu_custom_call.1} parent=1 // pred_check
      _
    $region7: #{tpu_custom_call.1} parent=1 // pred_check_branch
      %19 = sbr.rel (0) target = $region9
    $region8: #{tpu_custom_call.1} parent=1 // pred_region
      %20 = dma.done [#allocation4], 128
    $region9: #{tpu_custom_call.1} parent=1 // pred_fallthru
      _
    %p21 = scmp.eq.s32.totalorder 0, 0
    // Predicated region
    $region10: #{tpu_custom_call.1} parent=1 // pred_check
      %p22 = pneg %p21
    $region11: #{tpu_custom_call.1} parent=1 // pred_check_branch
      %24 = sbr.rel (%p22) target = $region13
    $region12: #{tpu_custom_call.1} parent=1 // pred_region
      %vm25 = vcmask 0
      %26 = vst.msk [vmem:[#allocation2] sm:$0x1] %vm25, 0.0
    $region13: #{tpu_custom_call.1} parent=1 // pred_fallthru
      _
    %v27 = vld [vmem:[#allocation3] sm:$0xff]
    %v28 = vlaneseq
    %v29 = vshrl.u32 %v28, 7
    %v30 = vlaneseq
    %v31 = vand.u32 %v30, 127
    %s32 = smul.u32 0, 8
    %v33 = vstv %s32
    %v34 = vadd.s32 %v29, %v33
    %vm35 = vcmp.eq.s32.totalorder %v34, %v31
    %v36 = vsel %vm35, %v27, 0.0
    %vm37 = vcmask 64512
    %v38 = vsel %vm37, %v36, 0.0
    %39 = vadd.xlane.f32.xlu0 %v38
    %v40 = vpop.xlane.xlu0 %39
    %v41 = vsub.f32 %v27, %v40
    %v42 = vmul.f32 %v41, 0.5
    %v43 = vtanh.pop %v42
    %v44 = vmul.f32 %v27, %v27
    %v45 = vmul.f32 %v44, 0.5
    %v46 = vtanh.pop %v45
    %v47 = vadd.f32 %v43, %v46
    %v48 = vld [vmem:[#allocation2] sm:$0x1]
    %v49 = vsel %vm37, %v47, 0.0
    %50 = vadd.xlane.f32.xlu0 %v49
    %v51 = vpop.xlane.xlu0 %50
    %v52 = vrot.slane %v51, 4
    %v53 = vadd.f32 %v51, %v52
    %v54 = vrot.slane %v53, 2
    %v55 = vadd.f32 %v53, %v54
    %v56 = vrot.slane %v55, 1
    %v57 = vadd.f32 %v55, %v56
    %s58 = vtos %v57
    %v59 = vstv %s58
    %v60 = vmul.f32 %v59, 0.5
    %v61 = vadd.f32 %v48, %v60
    %vm62 = vcmask 0
    %63 = vst.msk [vmem:[#allocation2] sm:$0x1] %vm62, %v61
    // Predicated region
    $region14: #{tpu_custom_call.1} parent=1 // pred_check
      %p64 = pneg %p21
    $region15: #{tpu_custom_call.1} parent=1 // pred_check_branch
      %66 = sbr.rel (%p64) target = $region17
    $region16: #{tpu_custom_call.1} parent=1 // pred_region
      %v67 = vld [vmem:[#allocation2] sm:$0x1]
      %v68 = vrcp.pop 64.0
      %v69 = vmul.f32 %v67, %v68
      %v70 = vadd.f32 %v69, 1.0
      %71 = vst.msk [vmem:[#allocation6] sm:$0x1] %vm62, %v70
    $region17: #{tpu_custom_call.1} parent=1 // pred_fallthru
      _
    // Predicated region
    $region18: #{tpu_custom_call.1} parent=1 // pred_check
      _
    $region19: #{tpu_custom_call.1} parent=1 // pred_check_branch
      %73 = sbr.rel (0) target = $region21
    $region20: #{tpu_custom_call.1} parent=1 // pred_region
      %s75 = ssub.s32 16, 16
      %76 = vsyncadd [#allocation5], %s75
      %s78 = sshll.u32 [#allocation6], 4
      %s79 = int_to_ptr.vmem [resolvable:$true] %s78
      %81 = dma.vmem_to_hbm [thread:$0]  %s79, 16, %s1, [#allocation5]
    $region21: #{tpu_custom_call.1} parent=1 // pred_fallthru
      _
    // Predicated region
    $region22: #{tpu_custom_call.1} parent=1 // pred_check
      _
    $region23: #{tpu_custom_call.1} parent=1 // pred_check_branch
      %83 = sbr.rel (0) target = $region25
    $region24: #{tpu_custom_call.1} parent=1 // pred_region
      %84 = dma.done [#allocation5], 16
    $region25: #{tpu_custom_call.1} parent=1 // pred_fallthru
      _
    %85 = vsyncpa [#allocation4], 1
    %86 = vsyncpa [#allocation5], 1

</llo_original>
